<compile_context>
chip_gen: v7x
topology: tpu7x:2x2x1
jax: 0.10.0
libtpu: 0.0.40
codegen_flags: <defaults>
</compile_context>

<pallas_src>
import jax
import jax.numpy as jnp
from jax import lax
from jax.experimental import pallas as pl
from jax.experimental.pallas import tpu as pltpu


# Layer sizes of the MLP: 3 -> 4 -> 5 -> 1
F_IN, H1, H2, F_OUT = 3, 4, 5, 1
SUB = 8        # strip-mine granularity along the row axis (one vreg of sublanes)
LANES = 128    # lane width


def mlp_kernel(x_ref, w1_ref, b1_ref, w2_ref, b2_ref, w3_ref, b3_ref, o_ref):
    """One (F_IN, TILE_ROWS, 128) batch tile.

    x_ref : (3, TILE_ROWS, 128) f32 VMEM -- batch packed over sublanes + lanes
    w*_ref: flattened (out*in,) f32 SMEM, row-major torch (out, in) layout
    b*_ref: (out,) f32 SMEM
    o_ref : (TILE_ROWS, 128) f32 VMEM    -- dense output tile
    """
    tile_rows = o_ref.shape[0]
    n_sub = tile_rows // SUB  # tile_rows is guaranteed a multiple of SUB

    # Hoist all scalar weight/bias reads out of the strip-mine loop
    # (loop-invariant; keeps SMEM scalar-load pressure off the inner loop).
    w1 = [[w1_ref[o * F_IN + i] for i in range(F_IN)] for o in range(H1)]
    b1 = [b1_ref[o] for o in range(H1)]
    w2 = [[w2_ref[o * H1 + i] for i in range(H1)] for o in range(H2)]
    b2 = [b2_ref[o] for o in range(H2)]
    w3 = [w3_ref[i] for i in range(H2)]
    b3 = b3_ref[0]

    def sub_block(s, carry):
        r0 = pl.multiple_of(s * SUB, SUB)
        xs = [x_ref[i, pl.ds(r0, SUB), :] for i in range(F_IN)]   # (SUB, 128) each

        # Layer 1: 3 -> 4, ReLU   (scalar-from-SMEM x vector FMAs on the VPU)
        h1 = []
        for o in range(H1):
            acc = xs[0] * w1[o][0]
            for i in range(1, F_IN):
                acc = acc + xs[i] * w1[o][i]
            h1.append(jnp.maximum(acc + b1[o], 0.0))

        # Layer 2: 4 -> 5, ReLU
        h2 = []
        for o in range(H2):
            acc = h1[0] * w2[o][0]
            for i in range(1, H1):
                acc = acc + h1[i] * w2[o][i]
            h2.append(jnp.maximum(acc + b2[o], 0.0))

        # Layer 3: 5 -> 1, sigmoid via tanh (EUP op; overflow-free, no select)
        acc = h2[0] * w3[0]
        for i in range(1, H2):
            acc = acc + h2[i] * w3[i]
        z = acc + b3
        o_ref[pl.ds(r0, SUB), :] = (0.5 * jnp.tanh(0.5 * z) + 0.5).astype(o_ref.dtype)
        return carry

    lax.fori_loop(0, n_sub, sub_block, 0, unroll=min(4, n_sub))


def _round_up(v, m):
    return (v + m - 1) // m * m


def mlp_forward(x, w1, b1, w2, b2, w3, b3, *, tile_rows=1024):
    """x: (N, 3) f32. Weights torch-convention (out, in); biases (out,).
    Returns (N, 1) f32 -- identical to the PyTorch module's forward.

    tile_rows rows of 128 samples per grid step (default 1024 rows = 128K
    samples ~= 2 MiB moved per step; double-buffered in+out ~= 4 MiB VMEM,
    comfortably inside v5e/v6e/v7x scoped-VMEM budgets)."""
    n = x.shape[0]

    # Pad the batch only to one dense (8 x 128) vreg-tile of samples, NOT to a
    # full multiple of the (possibly large) grid tile.
    n_pad = _round_up(max(n, 1), SUB * LANES)
    rows = n_pad // LANES                                  # multiple of 8
    tile_rows = min(_round_up(max(int(tile_rows), SUB), SUB), rows)

    # Features-major, batch packed over (rows, 128). pad + transpose + reshape
    # fuse into a single copy under jit.
    # TODO(synk): accept a features-major (3, N) input to skip this transpose.
    xt = jnp.pad(x.astype(jnp.float32), ((0, n_pad - n), (0, 0))).T.reshape(
        F_IN, rows, LANES)

    smem = pl.BlockSpec(memory_space=pltpu.MemorySpace.SMEM)  # whole-array resident
    out = pl.pallas_call(
        mlp_kernel,
        out_shape=jax.ShapeDtypeStruct((rows, LANES), jnp.float32),
        grid=(pl.cdiv(rows, tile_rows),),          # ragged last block is masked
        in_specs=[
            pl.BlockSpec((F_IN, tile_rows, LANES), lambda j: (0, j, 0)),  # x tile
            smem, smem,                                                   # w1, b1
            smem, smem,                                                   # w2, b2
            smem, smem,                                                   # w3, b3
        ],
        out_specs=pl.BlockSpec((tile_rows, LANES), lambda j: (j, 0)),
        compiler_params=pltpu.CompilerParams(
            dimension_semantics=("parallel",),     # megacore shard on v7x
            vmem_limit_bytes=32 << 20,
        ),
    )(
        xt,
        w1.reshape(-1), b1.reshape(-1),
        w2.reshape(-1), b2.reshape(-1),
        w3.reshape(-1), b3.reshape(-1),
    )
    return out.reshape(-1)[:n].reshape(n, 1)


def init_params(key):
    # Mimics torch.nn.Linear init: U(-1/sqrt(fan_in), 1/sqrt(fan_in)),
    # weights stored torch-style as (out, in), biases as (out,).
    ks = jax.random.split(key, 6)

    def linear(kw, kb, fan_in, fan_out):
        bound = 1.0 / jnp.sqrt(jnp.float32(fan_in))
        w = jax.random.uniform(kw, (fan_out, fan_in), jnp.float32, -bound, bound)
        b = jax.random.uniform(kb, (fan_out,), jnp.float32, -bound, bound)
        return w, b

    w1, b1 = linear(ks[0], ks[1], F_IN, H1)
    w2, b2 = linear(ks[2], ks[3], H1, H2)
    w3, b3 = linear(ks[4], ks[5], H2, F_OUT)
    return w1, b1, w2, b2, w3, b3


def reference_forward(x, w1, b1, w2, b2, w3, b3):
    h = jnp.maximum(x @ w1.T + b1, 0.0)
    h = jnp.maximum(h @ w2.T + b2, 0.0)
    return jax.nn.sigmoid(h @ w3.T + b3)


if __name__ == "__main__":
    key = jax.random.PRNGKey(0)
    k_x, k_p = jax.random.split(key)
    params = init_params(k_p)

    fwd = jax.jit(mlp_forward, static_argnames=("tile_rows",))

    # Case 1: spec-sized tiny batch (grid = 1 step).
    # Case 2: non-multiple batch, minimal tile.
    # Case 3: multi-step grid with a ragged last block (exercises padding,
    #         pipelining, and OOB store masking).
    for batch, t_rows in ((8, 1024), (300, 8), (2500, 16)):
        x = jax.random.normal(jax.random.fold_in(k_x, batch), (batch, F_IN),
                              dtype=jnp.float32)
        out = jax.block_until_ready(fwd(x, *params, tile_rows=t_rows))
        ref = reference_forward(x, *params)
        assert out.shape == (batch, 1)
        assert jnp.allclose(out, ref, atol=1e-5, rtol=1e-5), (batch, t_rows)

    print("KERNEL_OK")
</pallas_src>

<mosaic_0001>
module attributes {stable_mosaic.version = 11 : i64} {
  func.func @mlp_kernel(%arg0: i32, %arg1: memref<3x8x128xf32, #tpu.memory_space<vmem>>, %arg2: memref<12xf32, #tpu.memory_space<smem>>, %arg3: memref<4xf32, #tpu.memory_space<smem>>, %arg4: memref<20xf32, #tpu.memory_space<smem>>, %arg5: memref<5xf32, #tpu.memory_space<smem>>, %arg6: memref<5xf32, #tpu.memory_space<smem>>, %arg7: memref<1xf32, #tpu.memory_space<smem>>, %arg8: memref<8x128xf32, #tpu.memory_space<vmem>>) attributes {dimension_semantics = [#tpu.dimension_semantics<parallel>], iteration_bounds = array<i64: 1>, scalar_prefetch = 0 : i64, scratch_operands = 0 : i64, tpu.core_type = #tpu.core_type<tc>, window_params = [{transform_indices = @transform_0, window_bounds = array<i64: 3, 8, 128>}, {transform_indices = @transform_1, window_bounds = array<i64: 12>}, {transform_indices = @transform_2, window_bounds = array<i64: 4>}, {transform_indices = @transform_3, window_bounds = array<i64: 20>}, {transform_indices = @transform_4, window_bounds = array<i64: 5>}, {transform_indices = @transform_5, window_bounds = array<i64: 5>}, {transform_indices = @transform_6, window_bounds = array<i64: 1>}, {transform_indices = @transform_7, window_bounds = array<i64: 8, 128>}]} {
    %c0 = arith.constant 0 : index
    %0 = memref.load %arg2[%c0] : memref<12xf32, #tpu.memory_space<smem>>
    %c1 = arith.constant 1 : index
    %1 = memref.load %arg2[%c1] : memref<12xf32, #tpu.memory_space<smem>>
    %c2 = arith.constant 2 : index
    %2 = memref.load %arg2[%c2] : memref<12xf32, #tpu.memory_space<smem>>
    %c3 = arith.constant 3 : index
    %3 = memref.load %arg2[%c3] : memref<12xf32, #tpu.memory_space<smem>>
    %c4 = arith.constant 4 : index
    %4 = memref.load %arg2[%c4] : memref<12xf32, #tpu.memory_space<smem>>
    %c5 = arith.constant 5 : index
    %5 = memref.load %arg2[%c5] : memref<12xf32, #tpu.memory_space<smem>>
    %c6 = arith.constant 6 : index
    %6 = memref.load %arg2[%c6] : memref<12xf32, #tpu.memory_space<smem>>
    %c7 = arith.constant 7 : index
    %7 = memref.load %arg2[%c7] : memref<12xf32, #tpu.memory_space<smem>>
    %c8 = arith.constant 8 : index
    %8 = memref.load %arg2[%c8] : memref<12xf32, #tpu.memory_space<smem>>
    %c9 = arith.constant 9 : index
    %9 = memref.load %arg2[%c9] : memref<12xf32, #tpu.memory_space<smem>>
    %c10 = arith.constant 10 : index
    %10 = memref.load %arg2[%c10] : memref<12xf32, #tpu.memory_space<smem>>
    %c11 = arith.constant 11 : index
    %11 = memref.load %arg2[%c11] : memref<12xf32, #tpu.memory_space<smem>>
    %c0_0 = arith.constant 0 : index
    %12 = memref.load %arg3[%c0_0] : memref<4xf32, #tpu.memory_space<smem>>
    %c1_1 = arith.constant 1 : index
    %13 = memref.load %arg3[%c1_1] : memref<4xf32, #tpu.memory_space<smem>>
    %c2_2 = arith.constant 2 : index
    %14 = memref.load %arg3[%c2_2] : memref<4xf32, #tpu.memory_space<smem>>
    %c3_3 = arith.constant 3 : index
    %15 = memref.load %arg3[%c3_3] : memref<4xf32, #tpu.memory_space<smem>>
    %c0_4 = arith.constant 0 : index
    %16 = memref.load %arg4[%c0_4] : memref<20xf32, #tpu.memory_space<smem>>
    %c1_5 = arith.constant 1 : index
    %17 = memref.load %arg4[%c1_5] : memref<20xf32, #tpu.memory_space<smem>>
    %c2_6 = arith.constant 2 : index
    %18 = memref.load %arg4[%c2_6] : memref<20xf32, #tpu.memory_space<smem>>
    %c3_7 = arith.constant 3 : index
    %19 = memref.load %arg4[%c3_7] : memref<20xf32, #tpu.memory_space<smem>>
    %c4_8 = arith.constant 4 : index
    %20 = memref.load %arg4[%c4_8] : memref<20xf32, #tpu.memory_space<smem>>
    %c5_9 = arith.constant 5 : index
    %21 = memref.load %arg4[%c5_9] : memref<20xf32, #tpu.memory_space<smem>>
    %c6_10 = arith.constant 6 : index
    %22 = memref.load %arg4[%c6_10] : memref<20xf32, #tpu.memory_space<smem>>
    %c7_11 = arith.constant 7 : index
    %23 = memref.load %arg4[%c7_11] : memref<20xf32, #tpu.memory_space<smem>>
    %c8_12 = arith.constant 8 : index
    %24 = memref.load %arg4[%c8_12] : memref<20xf32, #tpu.memory_space<smem>>
    %c9_13 = arith.constant 9 : index
    %25 = memref.load %arg4[%c9_13] : memref<20xf32, #tpu.memory_space<smem>>
    %c10_14 = arith.constant 10 : index
    %26 = memref.load %arg4[%c10_14] : memref<20xf32, #tpu.memory_space<smem>>
    %c11_15 = arith.constant 11 : index
    %27 = memref.load %arg4[%c11_15] : memref<20xf32, #tpu.memory_space<smem>>
    %c12 = arith.constant 12 : index
    %28 = memref.load %arg4[%c12] : memref<20xf32, #tpu.memory_space<smem>>
    %c13 = arith.constant 13 : index
    %29 = memref.load %arg4[%c13] : memref<20xf32, #tpu.memory_space<smem>>
    %c14 = arith.constant 14 : index
    %30 = memref.load %arg4[%c14] : memref<20xf32, #tpu.memory_space<smem>>
    %c15 = arith.constant 15 : index
    %31 = memref.load %arg4[%c15] : memref<20xf32, #tpu.memory_space<smem>>
    %c16 = arith.constant 16 : index
    %32 = memref.load %arg4[%c16] : memref<20xf32, #tpu.memory_space<smem>>
    %c17 = arith.constant 17 : index
    %33 = memref.load %arg4[%c17] : memref<20xf32, #tpu.memory_space<smem>>
    %c18 = arith.constant 18 : index
    %34 = memref.load %arg4[%c18] : memref<20xf32, #tpu.memory_space<smem>>
    %c19 = arith.constant 19 : index
    %35 = memref.load %arg4[%c19] : memref<20xf32, #tpu.memory_space<smem>>
    %c0_16 = arith.constant 0 : index
    %36 = memref.load %arg5[%c0_16] : memref<5xf32, #tpu.memory_space<smem>>
    %c1_17 = arith.constant 1 : index
    %37 = memref.load %arg5[%c1_17] : memref<5xf32, #tpu.memory_space<smem>>
    %c2_18 = arith.constant 2 : index
    %38 = memref.load %arg5[%c2_18] : memref<5xf32, #tpu.memory_space<smem>>
    %c3_19 = arith.constant 3 : index
    %39 = memref.load %arg5[%c3_19] : memref<5xf32, #tpu.memory_space<smem>>
    %c4_20 = arith.constant 4 : index
    %40 = memref.load %arg5[%c4_20] : memref<5xf32, #tpu.memory_space<smem>>
    %c0_21 = arith.constant 0 : index
    %41 = memref.load %arg6[%c0_21] : memref<5xf32, #tpu.memory_space<smem>>
    %c1_22 = arith.constant 1 : index
    %42 = memref.load %arg6[%c1_22] : memref<5xf32, #tpu.memory_space<smem>>
    %c2_23 = arith.constant 2 : index
    %43 = memref.load %arg6[%c2_23] : memref<5xf32, #tpu.memory_space<smem>>
    %c3_24 = arith.constant 3 : index
    %44 = memref.load %arg6[%c3_24] : memref<5xf32, #tpu.memory_space<smem>>
    %c4_25 = arith.constant 4 : index
    %45 = memref.load %arg6[%c4_25] : memref<5xf32, #tpu.memory_space<smem>>
    %c0_26 = arith.constant 0 : index
    %46 = memref.load %arg7[%c0_26] : memref<1xf32, #tpu.memory_space<smem>>
    %c0_i32 = arith.constant 0 : i32
    %c8_i32 = arith.constant 8 : i32
    %47 = arith.muli %c0_i32, %c8_i32 : i32
    %48 = tpu.assume_multiple %47, 8 : i32
    %c0_27 = arith.constant 0 : index
    %49 = arith.index_cast %48 : i32 to index
    %c0_28 = arith.constant 0 : index
    %50 = vector.load %arg1[%c0_27, %49, %c0_28] : memref<3x8x128xf32, #tpu.memory_space<vmem>>, vector<1x8x128xf32>
    %51 = vector.shape_cast %50 : vector<1x8x128xf32> to vector<8x128xf32>
    %c1_29 = arith.constant 1 : index
    %52 = arith.index_cast %48 : i32 to index
    %c0_30 = arith.constant 0 : index
    %53 = vector.load %arg1[%c1_29, %52, %c0_30] : memref<3x8x128xf32, #tpu.memory_space<vmem>>, vector<1x8x128xf32>
    %54 = vector.shape_cast %53 : vector<1x8x128xf32> to vector<8x128xf32>
    %c2_31 = arith.constant 2 : index
    %55 = arith.index_cast %48 : i32 to index
    %c0_32 = arith.constant 0 : index
    %56 = vector.load %arg1[%c2_31, %55, %c0_32] : memref<3x8x128xf32, #tpu.memory_space<vmem>>, vector<1x8x128xf32>
    %57 = vector.shape_cast %56 : vector<1x8x128xf32> to vector<8x128xf32>
    %58 = vector.broadcast %0 : f32 to vector<8x128xf32>
    %59 = arith.mulf %51, %58 : vector<8x128xf32>
    %60 = vector.broadcast %1 : f32 to vector<8x128xf32>
    %61 = arith.mulf %54, %60 : vector<8x128xf32>
    %62 = arith.addf %59, %61 : vector<8x128xf32>
    %63 = vector.broadcast %2 : f32 to vector<8x128xf32>
    %64 = arith.mulf %57, %63 : vector<8x128xf32>
    %65 = arith.addf %62, %64 : vector<8x128xf32>
    %66 = vector.broadcast %12 : f32 to vector<8x128xf32>
    %67 = arith.addf %65, %66 : vector<8x128xf32>
    %cst = arith.constant 0.000000e+00 : f32
    %68 = vector.broadcast %cst : f32 to vector<8x128xf32>
    %69 = arith.maximumf %67, %68 : vector<8x128xf32>
    %70 = vector.broadcast %3 : f32 to vector<8x128xf32>
    %71 = arith.mulf %51, %70 : vector<8x128xf32>
    %72 = vector.broadcast %4 : f32 to vector<8x128xf32>
    %73 = arith.mulf %54, %72 : vector<8x128xf32>
    %74 = arith.addf %71, %73 : vector<8x128xf32>
    %75 = vector.broadcast %5 : f32 to vector<8x128xf32>
    %76 = arith.mulf %57, %75 : vector<8x128xf32>
    %77 = arith.addf %74, %76 : vector<8x128xf32>
    %78 = vector.broadcast %13 : f32 to vector<8x128xf32>
    %79 = arith.addf %77, %78 : vector<8x128xf32>
    %cst_33 = arith.constant 0.000000e+00 : f32
    %80 = vector.broadcast %cst_33 : f32 to vector<8x128xf32>
    %81 = arith.maximumf %79, %80 : vector<8x128xf32>
    %82 = vector.broadcast %6 : f32 to vector<8x128xf32>
    %83 = arith.mulf %51, %82 : vector<8x128xf32>
    %84 = vector.broadcast %7 : f32 to vector<8x128xf32>
    %85 = arith.mulf %54, %84 : vector<8x128xf32>
    %86 = arith.addf %83, %85 : vector<8x128xf32>
    %87 = vector.broadcast %8 : f32 to vector<8x128xf32>
    %88 = arith.mulf %57, %87 : vector<8x128xf32>
    %89 = arith.addf %86, %88 : vector<8x128xf32>
    %90 = vector.broadcast %14 : f32 to vector<8x128xf32>
    %91 = arith.addf %89, %90 : vector<8x128xf32>
    %cst_34 = arith.constant 0.000000e+00 : f32
    %92 = vector.broadcast %cst_34 : f32 to vector<8x128xf32>
    %93 = arith.maximumf %91, %92 : vector<8x128xf32>
    %94 = vector.broadcast %9 : f32 to vector<8x128xf32>
    %95 = arith.mulf %51, %94 : vector<8x128xf32>
    %96 = vector.broadcast %10 : f32 to vector<8x128xf32>
    %97 = arith.mulf %54, %96 : vector<8x128xf32>
    %98 = arith.addf %95, %97 : vector<8x128xf32>
    %99 = vector.broadcast %11 : f32 to vector<8x128xf32>
    %100 = arith.mulf %57, %99 : vector<8x128xf32>
    %101 = arith.addf %98, %100 : vector<8x128xf32>
    %102 = vector.broadcast %15 : f32 to vector<8x128xf32>
    %103 = arith.addf %101, %102 : vector<8x128xf32>
    %cst_35 = arith.constant 0.000000e+00 : f32
    %104 = vector.broadcast %cst_35 : f32 to vector<8x128xf32>
    %105 = arith.maximumf %103, %104 : vector<8x128xf32>
    %106 = vector.broadcast %16 : f32 to vector<8x128xf32>
    %107 = arith.mulf %69, %106 : vector<8x128xf32>
    %108 = vector.broadcast %17 : f32 to vector<8x128xf32>
    %109 = arith.mulf %81, %108 : vector<8x128xf32>
    %110 = arith.addf %107, %109 : vector<8x128xf32>
    %111 = vector.broadcast %18 : f32 to vector<8x128xf32>
    %112 = arith.mulf %93, %111 : vector<8x128xf32>
    %113 = arith.addf %110, %112 : vector<8x128xf32>
    %114 = vector.broadcast %19 : f32 to vector<8x128xf32>
    %115 = arith.mulf %105, %114 : vector<8x128xf32>
    %116 = arith.addf %113, %115 : vector<8x128xf32>
    %117 = vector.broadcast %36 : f32 to vector<8x128xf32>
    %118 = arith.addf %116, %117 : vector<8x128xf32>
    %cst_36 = arith.constant 0.000000e+00 : f32
    %119 = vector.broadcast %cst_36 : f32 to vector<8x128xf32>
    %120 = arith.maximumf %118, %119 : vector<8x128xf32>
    %121 = vector.broadcast %20 : f32 to vector<8x128xf32>
    %122 = arith.mulf %69, %121 : vector<8x128xf32>
    %123 = vector.broadcast %21 : f32 to vector<8x128xf32>
    %124 = arith.mulf %81, %123 : vector<8x128xf32>
    %125 = arith.addf %122, %124 : vector<8x128xf32>
    %126 = vector.broadcast %22 : f32 to vector<8x128xf32>
    %127 = arith.mulf %93, %126 : vector<8x128xf32>
    %128 = arith.addf %125, %127 : vector<8x128xf32>
    %129 = vector.broadcast %23 : f32 to vector<8x128xf32>
    %130 = arith.mulf %105, %129 : vector<8x128xf32>
    %131 = arith.addf %128, %130 : vector<8x128xf32>
    %132 = vector.broadcast %37 : f32 to vector<8x128xf32>
    %133 = arith.addf %131, %132 : vector<8x128xf32>
    %cst_37 = arith.constant 0.000000e+00 : f32
    %134 = vector.broadcast %cst_37 : f32 to vector<8x128xf32>
    %135 = arith.maximumf %133, %134 : vector<8x128xf32>
    %136 = vector.broadcast %24 : f32 to vector<8x128xf32>
    %137 = arith.mulf %69, %136 : vector<8x128xf32>
    %138 = vector.broadcast %25 : f32 to vector<8x128xf32>
    %139 = arith.mulf %81, %138 : vector<8x128xf32>
    %140 = arith.addf %137, %139 : vector<8x128xf32>
    %141 = vector.broadcast %26 : f32 to vector<8x128xf32>
    %142 = arith.mulf %93, %141 : vector<8x128xf32>
    %143 = arith.addf %140, %142 : vector<8x128xf32>
    %144 = vector.broadcast %27 : f32 to vector<8x128xf32>
    %145 = arith.mulf %105, %144 : vector<8x128xf32>
    %146 = arith.addf %143, %145 : vector<8x128xf32>
    %147 = vector.broadcast %38 : f32 to vector<8x128xf32>
    %148 = arith.addf %146, %147 : vector<8x128xf32>
    %cst_38 = arith.constant 0.000000e+00 : f32
    %149 = vector.broadcast %cst_38 : f32 to vector<8x128xf32>
    %150 = arith.maximumf %148, %149 : vector<8x128xf32>
    %151 = vector.broadcast %28 : f32 to vector<8x128xf32>
    %152 = arith.mulf %69, %151 : vector<8x128xf32>
    %153 = vector.broadcast %29 : f32 to vector<8x128xf32>
    %154 = arith.mulf %81, %153 : vector<8x128xf32>
    %155 = arith.addf %152, %154 : vector<8x128xf32>
    %156 = vector.broadcast %30 : f32 to vector<8x128xf32>
    %157 = arith.mulf %93, %156 : vector<8x128xf32>
    %158 = arith.addf %155, %157 : vector<8x128xf32>
    %159 = vector.broadcast %31 : f32 to vector<8x128xf32>
    %160 = arith.mulf %105, %159 : vector<8x128xf32>
    %161 = arith.addf %158, %160 : vector<8x128xf32>
    %162 = vector.broadcast %39 : f32 to vector<8x128xf32>
    %163 = arith.addf %161, %162 : vector<8x128xf32>
    %cst_39 = arith.constant 0.000000e+00 : f32
    %164 = vector.broadcast %cst_39 : f32 to vector<8x128xf32>
    %165 = arith.maximumf %163, %164 : vector<8x128xf32>
    %166 = vector.broadcast %32 : f32 to vector<8x128xf32>
    %167 = arith.mulf %69, %166 : vector<8x128xf32>
    %168 = vector.broadcast %33 : f32 to vector<8x128xf32>
    %169 = arith.mulf %81, %168 : vector<8x128xf32>
    %170 = arith.addf %167, %169 : vector<8x128xf32>
    %171 = vector.broadcast %34 : f32 to vector<8x128xf32>
    %172 = arith.mulf %93, %171 : vector<8x128xf32>
    %173 = arith.addf %170, %172 : vector<8x128xf32>
    %174 = vector.broadcast %35 : f32 to vector<8x128xf32>
    %175 = arith.mulf %105, %174 : vector<8x128xf32>
    %176 = arith.addf %173, %175 : vector<8x128xf32>
    %177 = vector.broadcast %40 : f32 to vector<8x128xf32>
    %178 = arith.addf %176, %177 : vector<8x128xf32>
    %cst_40 = arith.constant 0.000000e+00 : f32
    %179 = vector.broadcast %cst_40 : f32 to vector<8x128xf32>
    %180 = arith.maximumf %178, %179 : vector<8x128xf32>
    %181 = vector.broadcast %41 : f32 to vector<8x128xf32>
    %182 = arith.mulf %120, %181 : vector<8x128xf32>
    %183 = vector.broadcast %42 : f32 to vector<8x128xf32>
    %184 = arith.mulf %135, %183 : vector<8x128xf32>
    %185 = arith.addf %182, %184 : vector<8x128xf32>
    %186 = vector.broadcast %43 : f32 to vector<8x128xf32>
    %187 = arith.mulf %150, %186 : vector<8x128xf32>
    %188 = arith.addf %185, %187 : vector<8x128xf32>
    %189 = vector.broadcast %44 : f32 to vector<8x128xf32>
    %190 = arith.mulf %165, %189 : vector<8x128xf32>
    %191 = arith.addf %188, %190 : vector<8x128xf32>
    %192 = vector.broadcast %45 : f32 to vector<8x128xf32>
    %193 = arith.mulf %180, %192 : vector<8x128xf32>
    %194 = arith.addf %191, %193 : vector<8x128xf32>
    %195 = vector.broadcast %46 : f32 to vector<8x128xf32>
    %196 = arith.addf %194, %195 : vector<8x128xf32>
    %cst_41 = arith.constant 5.000000e-01 : f32
    %197 = vector.broadcast %cst_41 : f32 to vector<8x128xf32>
    %198 = arith.mulf %197, %196 : vector<8x128xf32>
    %199 = math.tanh %198 : vector<8x128xf32>
    %cst_42 = arith.constant 5.000000e-01 : f32
    %200 = vector.broadcast %cst_42 : f32 to vector<8x128xf32>
    %201 = arith.mulf %200, %199 : vector<8x128xf32>
    %cst_43 = arith.constant 5.000000e-01 : f32
    %202 = vector.broadcast %cst_43 : f32 to vector<8x128xf32>
    %203 = arith.addf %201, %202 : vector<8x128xf32>
    %204 = arith.index_cast %48 : i32 to index
    %c0_44 = arith.constant 0 : index
    %205 = vector.load %arg8[%204, %c0_44] : memref<8x128xf32, #tpu.memory_space<vmem>>, vector<8x128xf32>
    tpu.vector_store %arg8[%204, %c0_44], %203 {strides = array<i32>} : memref<8x128xf32, #tpu.memory_space<vmem>>, vector<8x128xf32>,
    %c1_i32 = arith.constant 1 : i32
    return
  }
  func.func @transform_0(%arg0: i32) -> (i32, i32, i32) {
    %c0_i32 = arith.constant 0 : i32
    %c0_i32_0 = arith.constant 0 : i32
    %c0_i32_1 = arith.constant 0 : i32
    return %c0_i32, %arg0, %c0_i32_0 : i32, i32, i32
  }
  func.func @transform_1(%arg0: i32) -> i32 {
    %c0_i32 = arith.constant 0 : i32
    %c0_i32_0 = arith.constant 0 : i32
    return %c0_i32 : i32
  }
  func.func @transform_2(%arg0: i32) -> i32 {
    %c0_i32 = arith.constant 0 : i32
    %c0_i32_0 = arith.constant 0 : i32
    return %c0_i32 : i32
  }
  func.func @transform_3(%arg0: i32) -> i32 {
    %c0_i32 = arith.constant 0 : i32
    %c0_i32_0 = arith.constant 0 : i32
    return %c0_i32 : i32
  }
  func.func @transform_4(%arg0: i32) -> i32 {
    %c0_i32 = arith.constant 0 : i32
    %c0_i32_0 = arith.constant 0 : i32
    return %c0_i32 : i32
  }
  func.func @transform_5(%arg0: i32) -> i32 {
    %c0_i32 = arith.constant 0 : i32
    %c0_i32_0 = arith.constant 0 : i32
    return %c0_i32 : i32
  }
  func.func @transform_6(%arg0: i32) -> i32 {
    %c0_i32 = arith.constant 0 : i32
    %c0_i32_0 = arith.constant 0 : i32
    return %c0_i32 : i32
  }
  func.func @transform_7(%arg0: i32) -> (i32, i32) {
    %c0_i32 = arith.constant 0 : i32
    %c0_i32_0 = arith.constant 0 : i32
    return %arg0, %c0_i32 : i32, i32
  }
}

</mosaic_0001>

<llo_original>
// kernel: mlp_forward.1
$region0: #{mlp_forward.1}
  #allocation0 [shape = 'u32[]', space=smem, size = 0x4, offset = 0x4, fixed_abs, tag = 'smem constant byte address 0x4 - core index']
  #allocation1 [shape = 'u32[144,128]{1,0:T(1,128)}', space=vmem, size = 0x12000, scoped, tag = 'internal scratch']
  #allocation2 [shape = 'f32[1]{0:T(128)S(6)}', space=smem, size = 0x200, scoped, tag = 'scoped memory for mlp_forward.1']
  %s0 = inlined_call_operand.vmem [shape: f32[3,8,128], index: 0, kind: input, shape index: {}]
  %s1 = inlined_call_operand.vmem [shape: f32[12], index: 1, kind: input, shape index: {}]
  %s2 = inlined_call_operand.vmem [shape: f32[4], index: 2, kind: input, shape index: {}]
  %s3 = inlined_call_operand.vmem [shape: f32[20], index: 3, kind: input, shape index: {}]
  %s4 = inlined_call_operand.vmem [shape: f32[5], index: 4, kind: input, shape index: {}]
  %s5 = inlined_call_operand.vmem [shape: f32[5], index: 5, kind: input, shape index: {}]
  %s6 = inlined_call_operand.<no memory space> [shape: f32[1], index: 6, kind: input, shape index: {}]
  %s7 = inlined_call_operand.vmem [shape: f32[8,128], index: 7, kind: output, shape index: {}]
  %s8 = sld [smem:[#allocation0]]
  $region58: #{mlp_forward.1} parent=0
    _
  %s10 = ssub.s32 1, %s8
  %s11 = scalar_select 0, %s10, %s8
  %12 = sst [smem:[#allocation2]] %s6
  $region1: #{mlp_forward.1} parent=0
    #allocation3 [shape = 'u8[512]{0}', space=smem, size = 0x200, scoped, tag = 'input window, operand 1, single buffered']
    #allocation4 [shape = 's32[1]{0}', space=sflag, size = 0x4, scoped, tag = 'scoped memory for mlp_forward.1']
    #allocation5 [shape = 'u8[512]{0}', space=smem, size = 0x200, scoped, tag = 'input window, operand 2, single buffered']
    #allocation6 [shape = 's32[1]{0}', space=sflag, size = 0x4, scoped, tag = 'scoped memory for mlp_forward.1']
    #allocation7 [shape = 'u8[512]{0}', space=smem, size = 0x200, scoped, tag = 'input window, operand 3, single buffered']
    #allocation8 [shape = 'u8[512]{0}', space=smem, size = 0x200, scoped, tag = 'input window, operand 4, single buffered']
    #allocation9 [shape = 's32[1]{0}', space=sflag, size = 0x4, scoped, tag = 'scoped memory for mlp_forward.1']
    #allocation10 [shape = 'u8[512]{0}', space=smem, size = 0x200, scoped, tag = 'input window, operand 5, single buffered']
    %13 = vsyncpa [#allocation4], 0
    %14 = vsyncpa [#allocation6], 0
    %15 = vsyncpa [#allocation9], 0
    // Predicated region
    $region2: #{mlp_forward.1} parent=1 // pred_check
      _
    $region3: #{mlp_forward.1} parent=1 // pred_check_branch
      %17 = sbr.rel (0) target = $region5
    $region4: #{mlp_forward.1} parent=1 // pred_region
      _
    $region5: #{mlp_forward.1} parent=1 // pred_fallthru
      _
    // Predicated region
    $region6: #{mlp_forward.1} parent=1 // pred_check
      _
    $region7: #{mlp_forward.1} parent=1 // pred_check_branch
      %19 = sbr.rel (0) target = $region9
    $region8: #{mlp_forward.1} parent=1 // pred_region
      %s21 = ssub.s32 16, 16
      %22 = vsyncadd [#allocation4], %s21
      %s24 = sshll.u32 %s1, 4
      %s25 = int_to_ptr.vmem [resolvable:$true] %s24
      %27 = dma.vmem_to_smem %s25, 16, [#allocation3], [#allocation4]
    $region9: #{mlp_forward.1} parent=1 // pred_fallthru
      _
    // Predicated region
    $region10: #{mlp_forward.1} parent=1 // pred_check
      _
    $region11: #{mlp_forward.1} parent=1 // pred_check_branch
      %29 = sbr.rel (0) target = $region13
    $region12: #{mlp_forward.1} parent=1 // pred_region
      %s31 = ssub.s32 16, 16
      %32 = vsyncadd [#allocation6], %s31
      %s34 = sshll.u32 %s2, 4
      %s35 = int_to_ptr.vmem [resolvable:$true] %s34
      %37 = dma.vmem_to_smem %s35, 16, [#allocation5], [#allocation6]
    $region13: #{mlp_forward.1} parent=1 // pred_fallthru
      _
    // Predicated region
    $region14: #{mlp_forward.1} parent=1 // pred_check
      _
    $region15: #{mlp_forward.1} parent=1 // pred_check_branch
      %39 = sbr.rel (0) target = $region17
    $region16: #{mlp_forward.1} parent=1 // pred_region
      %s41 = ssub.s32 16, 16
      %42 = vsyncadd [#allocation6], %s41
      %s44 = sshll.u32 %s3, 4
      %s45 = int_to_ptr.vmem [resolvable:$true] %s44
      %47 = dma.vmem_to_smem %s45, 16, [#allocation7], [#allocation6]
    $region17: #{mlp_forward.1} parent=1 // pred_fallthru
      _
    // Predicated region
    $region18: #{mlp_forward.1} parent=1 // pred_check
      _
    $region19: #{mlp_forward.1} parent=1 // pred_check_branch
      %49 = sbr.rel (0) target = $region21
    $region20: #{mlp_forward.1} parent=1 // pred_region
      %s51 = ssub.s32 16, 16
      %52 = vsyncadd [#allocation9], %s51
      %s54 = sshll.u32 %s4, 4
      %s55 = int_to_ptr.vmem [resolvable:$true] %s54
      %57 = dma.vmem_to_smem %s55, 16, [#allocation8], [#allocation9]
    $region21: #{mlp_forward.1} parent=1 // pred_fallthru
      _
    // Predicated region
    $region22: #{mlp_forward.1} parent=1 // pred_check
      _
    $region23: #{mlp_forward.1} parent=1 // pred_check_branch
      %59 = sbr.rel (0) target = $region25
    $region24: #{mlp_forward.1} parent=1 // pred_region
      %s61 = ssub.s32 16, 16
      %62 = vsyncadd [#allocation9], %s61
      %s64 = sshll.u32 %s5, 4
      %s65 = int_to_ptr.vmem [resolvable:$true] %s64
      %67 = dma.vmem_to_smem %s65, 16, [#allocation10], [#allocation9]
    $region25: #{mlp_forward.1} parent=1 // pred_fallthru
      _
    // Predicated region
    $region26: #{mlp_forward.1} parent=1 // pred_check
      _
    $region27: #{mlp_forward.1} parent=1 // pred_check_branch
      %69 = sbr.rel (0) target = $region29
    $region28: #{mlp_forward.1} parent=1 // pred_region
      _
    $region29: #{mlp_forward.1} parent=1 // pred_fallthru
      _
    // Predicated region
    $region30: #{mlp_forward.1} parent=1 // pred_check
      _
    $region31: #{mlp_forward.1} parent=1 // pred_check_branch
      %71 = sbr.rel (0) target = $region33
    $region32: #{mlp_forward.1} parent=1 // pred_region
      %72 = dma.done [#allocation4], 16
    $region33: #{mlp_forward.1} parent=1 // pred_fallthru
      _
    // Predicated region
    $region34: #{mlp_forward.1} parent=1 // pred_check
      _
    $region35: #{mlp_forward.1} parent=1 // pred_check_branch
      %74 = sbr.rel (0) target = $region37
    $region36: #{mlp_forward.1} parent=1 // pred_region
      %75 = dma.done [#allocation6], 16
    $region37: #{mlp_forward.1} parent=1 // pred_fallthru
      _
    // Predicated region
    $region38: #{mlp_forward.1} parent=1 // pred_check
      _
    $region39: #{mlp_forward.1} parent=1 // pred_check_branch
      %77 = sbr.rel (0) target = $region41
    $region40: #{mlp_forward.1} parent=1 // pred_region
      %78 = dma.done [#allocation6], 16
    $region41: #{mlp_forward.1} parent=1 // pred_fallthru
      _
    // Predicated region
    $region42: #{mlp_forward.1} parent=1 // pred_check
      _
    $region43: #{mlp_forward.1} parent=1 // pred_check_branch
      %80 = sbr.rel (0) target = $region45
    $region44: #{mlp_forward.1} parent=1 // pred_region
      %81 = dma.done [#allocation9], 16
    $region45: #{mlp_forward.1} parent=1 // pred_fallthru
      _
    // Predicated region
    $region46: #{mlp_forward.1} parent=1 // pred_check
      _
    $region47: #{mlp_forward.1} parent=1 // pred_check_branch
      %83 = sbr.rel (0) target = $region49
    $region48: #{mlp_forward.1} parent=1 // pred_region
      %84 = dma.done [#allocation9], 16
    $region49: #{mlp_forward.1} parent=1 // pred_fallthru
      _
    %85 = sfence
    %s86 = sld [smem:[#allocation3]]
    %s87 = sld [smem:[#allocation3 + $0x1]]
    %s88 = sld [smem:[#allocation3 + $0x2]]
    %s89 = sld [smem:[#allocation3 + $0x3]]
    %s90 = sld [smem:[#allocation3 + $0x4]]
    %s91 = sld [smem:[#allocation3 + $0x5]]
    %s92 = sld [smem:[#allocation3 + $0x6]]
    %s93 = sld [smem:[#allocation3 + $0x7]]
    %s94 = sld [smem:[#allocation3 + $0x8]]
    %s95 = sld [smem:[#allocation3 + $0x9]]
    %s96 = sld [smem:[#allocation3 + $0xa]]
    %s97 = sld [smem:[#allocation3 + $0xb]]
    %s98 = sld [smem:[#allocation5]]
    %s99 = sld [smem:[#allocation5 + $0x1]]
    %s100 = sld [smem:[#allocation5 + $0x2]]
    %s101 = sld [smem:[#allocation5 + $0x3]]
    %s102 = sld [smem:[#allocation7]]
    %s103 = sld [smem:[#allocation7 + $0x1]]
    %s104 = sld [smem:[#allocation7 + $0x2]]
    %s105 = sld [smem:[#allocation7 + $0x3]]
    %s106 = sld [smem:[#allocation7 + $0x4]]
    %s107 = sld [smem:[#allocation7 + $0x5]]
    %s108 = sld [smem:[#allocation7 + $0x6]]
    %s109 = sld [smem:[#allocation7 + $0x7]]
    %s110 = sld [smem:[#allocation7 + $0x8]]
    %s111 = sld [smem:[#allocation7 + $0x9]]
    %s112 = sld [smem:[#allocation7 + $0xa]]
    %s113 = sld [smem:[#allocation7 + $0xb]]
    %s114 = sld [smem:[#allocation7 + $0xc]]
    %s115 = sld [smem:[#allocation7 + $0xd]]
    %s116 = sld [smem:[#allocation7 + $0xe]]
    %s117 = sld [smem:[#allocation7 + $0xf]]
    %s118 = sld [smem:[#allocation7 + $0x10]]
    %s119 = sld [smem:[#allocation7 + $0x11]]
    %s120 = sld [smem:[#allocation7 + $0x12]]
    %s121 = sld [smem:[#allocation7 + $0x13]]
    %s122 = sld [smem:[#allocation8]]
    %s123 = sld [smem:[#allocation8 + $0x1]]
    %s124 = sld [smem:[#allocation8 + $0x2]]
    %s125 = sld [smem:[#allocation8 + $0x3]]
    %s126 = sld [smem:[#allocation8 + $0x4]]
    %s127 = sld [smem:[#allocation10]]
    %s128 = sld [smem:[#allocation10 + $0x1]]
    %s129 = sld [smem:[#allocation10 + $0x2]]
    %s130 = sld [smem:[#allocation10 + $0x3]]
    %s131 = sld [smem:[#allocation10 + $0x4]]
    %s132 = sld [smem:[#allocation2]]
    %v133 = vld [vmem:[%s0] sm:$0xff]
    %s134 = sadd.s32 0, 8
    %s135 = scalar_lea.vmem %s0, %s134
    %v136 = vld [vmem:[%s135] sm:$0xff]
    %s137 = sadd.s32 0, 16
    %s138 = scalar_lea.vmem %s0, %s137
    %v139 = vld [vmem:[%s138] sm:$0xff]
    %v140 = vstv %s86
    %v141 = vmul.f32 %v133, %v140
    %v142 = vstv %s87
    %v143 = vmul.f32 %v136, %v142
    %v144 = vadd.f32 %v141, %v143
    %v145 = vstv %s88
    %v146 = vmul.f32 %v139, %v145
    %v147 = vadd.f32 %v144, %v146
    %v148 = vstv %s98
    %v149 = vadd.f32 %v147, %v148
    %v150 = vmax.f32 %v149, 0.0
    %v151 = vstv %s89
    %v152 = vmul.f32 %v133, %v151
    %v153 = vstv %s90
    %v154 = vmul.f32 %v136, %v153
    %v155 = vadd.f32 %v152, %v154
    %v156 = vstv %s91
    %v157 = vmul.f32 %v139, %v156
    %v158 = vadd.f32 %v155, %v157
    %v159 = vstv %s99
    %v160 = vadd.f32 %v158, %v159
    %v161 = vmax.f32 %v160, 0.0
    %v162 = vstv %s92
    %v163 = vmul.f32 %v133, %v162
    %v164 = vstv %s93
    %v165 = vmul.f32 %v136, %v164
    %v166 = vadd.f32 %v163, %v165
    %v167 = vstv %s94
    %v168 = vmul.f32 %v139, %v167
    %v169 = vadd.f32 %v166, %v168
    %v170 = vstv %s100
    %v171 = vadd.f32 %v169, %v170
    %v172 = vmax.f32 %v171, 0.0
    %v173 = vstv %s95
    %v174 = vmul.f32 %v133, %v173
    %v175 = vstv %s96
    %v176 = vmul.f32 %v136, %v175
    %v177 = vadd.f32 %v174, %v176
    %v178 = vstv %s97
    %v179 = vmul.f32 %v139, %v178
    %v180 = vadd.f32 %v177, %v179
    %v181 = vstv %s101
    %v182 = vadd.f32 %v180, %v181
    %v183 = vmax.f32 %v182, 0.0
    %v184 = vstv %s102
    %v185 = vmul.f32 %v150, %v184
    %v186 = vstv %s103
    %v187 = vmul.f32 %v161, %v186
    %v188 = vadd.f32 %v185, %v187
    %v189 = vstv %s104
    %v190 = vmul.f32 %v172, %v189
    %v191 = vadd.f32 %v188, %v190
    %v192 = vstv %s105
    %v193 = vmul.f32 %v183, %v192
    %v194 = vadd.f32 %v191, %v193
    %v195 = vstv %s122
    %v196 = vadd.f32 %v194, %v195
    %v197 = vmax.f32 %v196, 0.0
    %v198 = vstv %s106
    %v199 = vmul.f32 %v150, %v198
    %v200 = vstv %s107
    %v201 = vmul.f32 %v161, %v200
    %v202 = vadd.f32 %v199, %v201
    %v203 = vstv %s108
    %v204 = vmul.f32 %v172, %v203
    %v205 = vadd.f32 %v202, %v204
    %v206 = vstv %s109
    %v207 = vmul.f32 %v183, %v206
    %v208 = vadd.f32 %v205, %v207
    %v209 = vstv %s123
    %v210 = vadd.f32 %v208, %v209
    %v211 = vmax.f32 %v210, 0.0
    %v212 = vstv %s110
    %v213 = vmul.f32 %v150, %v212
    %v214 = vstv %s111
    %v215 = vmul.f32 %v161, %v214
    %v216 = vadd.f32 %v213, %v215
    %v217 = vstv %s112
    %v218 = vmul.f32 %v172, %v217
    %v219 = vadd.f32 %v216, %v218
    %v220 = vstv %s113
    %v221 = vmul.f32 %v183, %v220
    %v222 = vadd.f32 %v219, %v221
    %v223 = vstv %s124
    %v224 = vadd.f32 %v222, %v223
    %v225 = vmax.f32 %v224, 0.0
    %v226 = vstv %s114
    %v227 = vmul.f32 %v150, %v226
    %v228 = vstv %s115
    %v229 = vmul.f32 %v161, %v228
    %v230 = vadd.f32 %v227, %v229
    %v231 = vstv %s116
    %v232 = vmul.f32 %v172, %v231
    %v233 = vadd.f32 %v230, %v232
    %v234 = vstv %s117
    %v235 = vmul.f32 %v183, %v234
    %v236 = vadd.f32 %v233, %v235
    %v237 = vstv %s125
    %v238 = vadd.f32 %v236, %v237
    %v239 = vmax.f32 %v238, 0.0
    %v240 = vstv %s118
    %v241 = vmul.f32 %v150, %v240
    %v242 = vstv %s119
    %v243 = vmul.f32 %v161, %v242
    %v244 = vadd.f32 %v241, %v243
    %v245 = vstv %s120
    %v246 = vmul.f32 %v172, %v245
    %v247 = vadd.f32 %v244, %v246
    %v248 = vstv %s121
    %v249 = vmul.f32 %v183, %v248
    %v250 = vadd.f32 %v247, %v249
    %v251 = vstv %s126
    %v252 = vadd.f32 %v250, %v251
    %v253 = vmax.f32 %v252, 0.0
    %v254 = vstv %s127
    %v255 = vmul.f32 %v197, %v254
    %v256 = vstv %s128
    %v257 = vmul.f32 %v211, %v256
    %v258 = vadd.f32 %v255, %v257
    %v259 = vstv %s129
    %v260 = vmul.f32 %v225, %v259
    %v261 = vadd.f32 %v258, %v260
    %v262 = vstv %s130
    %v263 = vmul.f32 %v239, %v262
    %v264 = vadd.f32 %v261, %v263
    %v265 = vstv %s131
    %v266 = vmul.f32 %v253, %v265
    %v267 = vadd.f32 %v264, %v266
    %v268 = vstv %s132
    %v269 = vadd.f32 %v267, %v268
    %v270 = vmul.f32 %v269, 0.5
    %v271 = vtanh.pop %v270
    %v272 = vmul.f32 %v271, 0.5
    %v273 = vadd.f32 %v272, 0.5
    %274 = vst [vmem:[%s7] sm:$0xff] %v273
    // Predicated region
    $region50: #{mlp_forward.1} parent=1 // pred_check
      _
    $region51: #{mlp_forward.1} parent=1 // pred_check_branch
      %276 = sbr.rel (0) target = $region53
    $region52: #{mlp_forward.1} parent=1 // pred_region
      _
    $region53: #{mlp_forward.1} parent=1 // pred_fallthru
      _
    // Predicated region
    $region54: #{mlp_forward.1} parent=1 // pred_check
      _
    $region55: #{mlp_forward.1} parent=1 // pred_check_branch
      %278 = sbr.rel (0) target = $region57
    $region56: #{mlp_forward.1} parent=1 // pred_region
      _
    $region57: #{mlp_forward.1} parent=1 // pred_fallthru
      _
    %279 = vsyncpa [#allocation4], 1
    %280 = vsyncpa [#allocation6], 1
    %281 = vsyncpa [#allocation9], 1

</llo_original>
